<compile_context>
chip_gen: v6e
topology: v6e:2x2x1
jax: 0.10.0
libtpu: 0.0.40
codegen_flags: <defaults>
</compile_context>

<pallas_src>
import math

import jax
import jax.numpy as jnp
from jax import lax
from jax.experimental import pallas as pl
from jax.experimental.pallas import tpu as pltpu

NEG_SLOPE = 0.2   # negative_slop
LAMB = 1.0        # lamb
K_HOP = 3         # k_hop
RATIO = 0.8       # ratio
# sample=True, sym_score_norm=True, sparse=True, sl=True (module defaults)

_LANE = 128
_MAX_TILE = 512   # bf16 adj blocks @512 keep the working set ~2-4 MiB


def _round_up(x, m):
    return ((x + m - 1) // m) * m


def _pick_tile(n):
    """Largest tile <= 512 that keeps padding to at most one tile."""
    return min(_MAX_TILE, _round_up(max(n, 1), _LANE))


def _leaky_relu(x):
    return jnp.where(x > 0, x, NEG_SLOPE * x)


# --------------------------------------------------------------------------
# Pallas kernels
# --------------------------------------------------------------------------
def _score_kernel(src_featT_ref, adj_ref, featT_ref, wa_ref, indeg_ref,
                  out_ref, agg_ref):
    """Fused node-attention + NodeInfoScore (sym_norm=True).

    Grid = (dst tiles "parallel", src tiles "arbitrary").  The adjacency is
    the RAW bf16 matrix; remove_self_loop is applied in-kernel by zeroing the
    global diagonal (it only lives where dst-tile == src-tile; the select is
    a handful of VPU ops hidden under the MXU).  All dst-indexed quantities
    stay lane-dense.
    """
    d = pl.program_id(0)
    s = pl.program_id(1)

    @pl.when(s == 0)
    def _():
        agg_ref[...] = jnp.zeros_like(agg_ref)

    adj_blk = adj_ref[...]                                   # [TS, TD] bf16
    rows = lax.broadcasted_iota(jnp.int32, adj_blk.shape, 0)
    cols = lax.broadcasted_iota(jnp.int32, adj_blk.shape, 1)
    diag = (rows == cols) & (d == s)
    adj_blk = jnp.where(diag, jnp.zeros_like(adj_blk), adj_blk)

    # agg[f, dst] += sum_src src_featT[f, src] * adj[src, dst]  (bf16 MXU, f32 acc)
    agg_ref[...] += jnp.dot(src_featT_ref[...], adj_blk,
                            preferred_element_type=jnp.float32)

    @pl.when(s == pl.num_programs(1) - 1)
    def _():
        featT = featT_ref[...]                               # [F, TD] f32
        wa = wa_ref[...]                                     # [F, 1]  (= W @ a)
        na = jnp.sum(featT * wa, axis=0, keepdims=True)      # [1, TD]
        na = jax.nn.sigmoid(_leaky_relu(na))
        # in-degrees include self loops (reference computes degrees BEFORE
        # dgl.remove_self_loop); they arrive precomputed, lane-dense.
        dst_norm = lax.rsqrt(jnp.maximum(indeg_ref[...], 1.0))   # [1, TD]
        dst_feat = agg_ref[...] * dst_norm                       # [F, TD]
        info = jnp.sum(jnp.abs(featT - dst_feat), axis=0, keepdims=True)
        out_ref[...] = info * na                                 # [1, TD]


def _matmul_kernel(a_ref, b_ref, o_ref, acc_ref):
    """Standard tiled (i, j, k) matmul: bf16 operands, f32 accumulation."""
    @pl.when(pl.program_id(2) == 0)
    def _():
        acc_ref[...] = jnp.zeros_like(acc_ref)

    acc_ref[...] += jnp.dot(a_ref[...], b_ref[...],
                            preferred_element_type=jnp.float32)

    @pl.when(pl.program_id(2) == pl.num_programs(2) - 1)
    def _():
        o_ref[...] = acc_ref[...]


def _edge_weight_kernel(right_ref, left_ref, eT_ref, out_ref):
    """wT[j,i] = leaky_relu(left[i] + right[j]) + lamb * e[i,j].

    Purely elementwise over (dst, src) tiles; the src/dst attention terms are
    precomputed in the wrapper.  Emitting the transposed (dst-major) matrix
    keeps the downstream sparsemax sort/cumsum on the lane axis.
    """
    s = right_ref[...] + left_ref[...]            # [Tj,1] + [1,Ti] -> [Tj,Ti]
    out_ref[...] = _leaky_relu(s) + LAMB * eT_ref[...]


# --------------------------------------------------------------------------
# pallas_call wrappers
# --------------------------------------------------------------------------
def _node_score(src_featT_b16, adj_b16, featT, wa, indeg_row, n_pad, f_pad, tile):
    grid = (n_pad // tile, n_pad // tile)         # (dst tiles, src tiles)
    return pl.pallas_call(
        _score_kernel,
        out_shape=jax.ShapeDtypeStruct((1, n_pad), jnp.float32),
        grid_spec=pltpu.PrefetchScalarGridSpec(
            num_scalar_prefetch=0,
            grid=grid,
            in_specs=[
                pl.BlockSpec((f_pad, tile), lambda d, s: (0, s)),   # src feat^T (bf16)
                pl.BlockSpec((tile, tile), lambda d, s: (s, d)),    # raw adj (bf16)
                pl.BlockSpec((f_pad, tile), lambda d, s: (0, d)),   # feat^T (f32)
                pl.BlockSpec((f_pad, 1), lambda d, s: (0, 0)),      # wa = W @ a
                pl.BlockSpec((1, tile), lambda d, s: (0, d)),       # in-degree row
            ],
            out_specs=pl.BlockSpec((1, tile), lambda d, s: (0, d)),
            scratch_shapes=[
                pltpu.VMEM((f_pad, tile), jnp.float32),             # agg accumulator
            ],
        ),
        compiler_params=pltpu.CompilerParams(
            dimension_semantics=("parallel", "arbitrary")),
    )(src_featT_b16, adj_b16, featT, wa, indeg_row)


def _square_matmul(a_b16, n_pad, tile):
    """Tiled A @ A for one k-hop expansion step (bf16 in, f32 out)."""
    grid = (n_pad // tile, n_pad // tile, n_pad // tile)
    return pl.pallas_call(
        _matmul_kernel,
        out_shape=jax.ShapeDtypeStruct((n_pad, n_pad), jnp.float32),
        grid_spec=pltpu.PrefetchScalarGridSpec(
            num_scalar_prefetch=0,
            grid=grid,
            in_specs=[pl.BlockSpec((tile, tile), lambda i, j, k: (i, k)),
                      pl.BlockSpec((tile, tile), lambda i, j, k: (k, j))],
            out_specs=pl.BlockSpec((tile, tile), lambda i, j, k: (i, j)),
            scratch_shapes=[pltpu.VMEM((tile, tile), jnp.float32)],
        ),
        compiler_params=pltpu.CompilerParams(
            dimension_semantics=("parallel", "parallel", "arbitrary")),
    )(a_b16, a_b16)


def _edge_weights_T(right_col, left_row, eT_pad, k_pad, tile):
    """Transposed (dst-major) structure-learning edge weights, tiled over (j,i)."""
    grid = (k_pad // tile, k_pad // tile)
    return pl.pallas_call(
        _edge_weight_kernel,
        out_shape=jax.ShapeDtypeStruct((k_pad, k_pad), jnp.float32),
        grid_spec=pltpu.PrefetchScalarGridSpec(
            num_scalar_prefetch=0,
            grid=grid,
            in_specs=[
                pl.BlockSpec((tile, 1), lambda j, i: (j, 0)),       # dst term (col)
                pl.BlockSpec((1, tile), lambda j, i: (0, i)),       # src term (row)
                pl.BlockSpec((tile, tile), lambda j, i: (j, i)),    # e^T tile
            ],
            out_specs=pl.BlockSpec((tile, tile), lambda j, i: (j, i)),
        ),
        compiler_params=pltpu.CompilerParams(
            dimension_semantics=("parallel", "parallel")),
    )(right_col, left_row, eT_pad)


# --------------------------------------------------------------------------
# JAX glue: sparsemax over incoming edges per destination node
# --------------------------------------------------------------------------
def _masked_sparsemax_lastaxis(w, mask):
    """edge_sparsemax on the transposed matrix: rows = destinations, so the
    sort / cumsum run along the last (lane) axis."""
    kk = w.shape[-1]
    neg = jnp.float32(-1e30)
    z = jnp.where(mask, w, neg)
    z_sorted = -jnp.sort(-z, axis=-1)                         # descending per row
    ks = jnp.arange(1, kk + 1, dtype=w.dtype)[None, :]
    csum = jnp.cumsum(z_sorted, axis=-1)
    support = (1.0 + ks * z_sorted) > csum
    k_z = jnp.maximum(
        jnp.sum(support.astype(w.dtype), axis=-1, keepdims=True), 1.0)
    csum_k = jnp.sum(jnp.where(support, z_sorted, 0.0), axis=-1, keepdims=True)
    tau = (csum_k - 1.0) / k_z
    p = jnp.maximum(z - tau, 0.0)
    return jnp.where(mask, p, 0.0)


# --------------------------------------------------------------------------
# HGPSLPool forward (dense-graph equivalent, sl=True, sample=True, sparse=True)
# --------------------------------------------------------------------------
def hgpsl_pool(feat, adj, params):
    n, f = feat.shape
    W, a, att = params["W"], params["a"], params["att"]

    f_pad = _round_up(f, _LANE)
    tile = _pick_tile(n)
    n_pad = _round_up(n, tile)
    k = int(math.ceil(RATIO * n))
    tile_k = _pick_tile(k)
    k_pad = _round_up(k, tile_k)

    # ---- wrapper prep: padding, degrees (raw adj, incl. self loops), folds --
    feat_pad = jnp.pad(feat, ((0, n_pad - n), (0, f_pad - f)))
    adj_pad = jnp.pad(adj, ((0, n_pad - n), (0, n_pad - n)))
    has_edge = (adj_pad != 0.0).astype(jnp.float32)
    out_deg_row = jnp.sum(has_edge, axis=1)[None, :]            # [1, n_pad]
    in_deg_row = jnp.sum(has_edge, axis=0, keepdims=True)       # [1, n_pad]
    featT = feat_pad.T                                          # [f_pad, n_pad] f32
    src_norm_row = lax.rsqrt(jnp.maximum(out_deg_row, 1.0))
    src_featT_b16 = (featT * src_norm_row).astype(jnp.bfloat16)
    adj_b16 = adj_pad.astype(jnp.bfloat16)                      # bf16 HBM stream
    wa = jnp.pad(jnp.dot(W, a), ((0, f_pad - f), (0, 0)))       # fold W @ a once

    # ---- fused node-attention + info score (Pallas, tiled, lane-dense) -----
    x_score_row = _node_score(src_featT_b16, adj_b16, featT, wa, in_deg_row,
                              n_pad, f_pad, tile)
    x_score = x_score_row[0, :n]

    # ---- top-k (glue): keep ceil(ratio * N) highest-scoring nodes ----------
    _, perm = lax.top_k(x_score, k)
    feat_p = feat[perm]

    # ---- k-hop densified adjacency: tiled bf16 matmul per hop + fused axpy --
    a_cur = adj_pad
    for _ in range(K_HOP):
        th = _square_matmul(a_cur.astype(jnp.bfloat16), n_pad, tile)
        m = jnp.max(th)
        # TODO(synk): scipy divides by two_hop.max() unguarded; guard the
        # all-zero (disconnected-graph) case instead of producing inf/nan.
        scale = jnp.where(m > 0.0, 1e-5 / m, 0.0)
        a_cur = th * scale + a_cur          # cheap fused XLA elementwise finalize

    # ---- pooled subgraph gather: two axis takes (no 2-D fancy gather) -------
    a_pool = jnp.take(jnp.take(a_cur, perm, axis=0), perm, axis=1)
    eye = jnp.eye(k, dtype=jnp.float32)
    # TODO(synk): the reference appends a parallel self-loop edge even if a
    # k-hop self-edge already exists; the dense form merges them by sum.
    e_pool = a_pool + eye
    edge_mask = (a_pool != 0.0) | (eye != 0.0)

    # ---- structure-learning pairwise attention (Pallas, dst-major) ---------
    feat_p_pad = jnp.pad(feat_p, ((0, k_pad - k), (0, f_pad - f)))
    att_l = jnp.pad(att[:, :f], ((0, 0), (0, f_pad - f)))       # [1, f_pad]
    att_r = jnp.pad(att[:, f:], ((0, 0), (0, f_pad - f)))       # [1, f_pad]
    left_row = jnp.dot(att_l, feat_p_pad.T)                     # [1, k_pad] src term
    right_col = jnp.dot(feat_p_pad, att_r.T)                    # [k_pad, 1] dst term
    eT_pad = jnp.pad(e_pool.T, ((0, k_pad - k), (0, k_pad - k)))
    wT = _edge_weights_T(right_col, left_row, eT_pad, k_pad, tile_k)

    # ---- sparse=True -> edge_sparsemax over incoming edges per destination --
    maskT = jnp.pad(edge_mask.T, ((0, k_pad - k), (0, k_pad - k)))
    weightsT = _masked_sparsemax_lastaxis(wT, maskT)[:k, :k]
    weights = weightsT.T                                         # back to [src, dst]

    keep = jnp.abs(weights) > 0
    e_feat = jnp.where(keep, weights, 0.0)
    pool_adj = keep                                              # dense pooled graph

    return pool_adj, feat_p, e_feat, perm, x_score


# --------------------------------------------------------------------------
# main
# --------------------------------------------------------------------------
if __name__ == "__main__":
    N, F = 16, 16   # num nodes, in_feat

    key = jax.random.PRNGKey(0)
    k1, k2, k3, k4, k5 = jax.random.split(key, 5)

    # deterministic xavier_normal parameter init (same shapes as the module)
    std_w = math.sqrt(2.0 / (F + F))
    std_a = math.sqrt(2.0 / (F + 1))
    std_att = math.sqrt(2.0 / (2 * F + 1))
    params = {
        "W": std_w * jax.random.normal(k1, (F, F), jnp.float32),          # node_attn_W
        "a": std_a * jax.random.normal(k2, (F, 1), jnp.float32),          # node_attn_a
        "att": std_att * jax.random.normal(k3, (1, 2 * F), jnp.float32),  # att
    }

    # synthetic graph: random directed edges, no self loops, e_feat = 1
    feat = jax.random.normal(k4, (N, F), jnp.float32)
    adj = (jax.random.uniform(k5, (N, N)) < 0.3).astype(jnp.float32)
    adj = adj * (1.0 - jnp.eye(N, dtype=jnp.float32))

    outs = hgpsl_pool(feat, adj, params)
    outs = jax.block_until_ready(outs)

    pool_adj, feat_p, e_feat, perm, x_score = outs
    K = int(math.ceil(RATIO * N))
    assert feat_p.shape == (K, F)
    assert e_feat.shape == (K, K)
    assert x_score.shape == (N,)
    assert bool(jnp.all(jnp.isfinite(e_feat)))
    print("KERNEL_OK")
</pallas_src>

<mosaic_0001>
module attributes {stable_mosaic.version = 11 : i64} {
  func.func @_score_kernel(%arg0: i32, %arg1: i32, %arg2: memref<128x128xbf16, #tpu.memory_space<vmem>>, %arg3: memref<128x128xbf16, #tpu.memory_space<vmem>>, %arg4: memref<128x128xf32, #tpu.memory_space<vmem>>, %arg5: memref<128x1xf32, #tpu.memory_space<vmem>>, %arg6: memref<1x128xf32, #tpu.memory_space<vmem>>, %arg7: memref<1x128xf32, #tpu.memory_space<vmem>>, %arg8: memref<128x128xf32, #tpu.memory_space<vmem>>) attributes {dimension_semantics = [#tpu.dimension_semantics<parallel>, #tpu.dimension_semantics<arbitrary>], iteration_bounds = array<i64: 1, 1>, scalar_prefetch = 0 : i64, scratch_operands = 1 : i64, tpu.core_type = #tpu.core_type<tc>, window_params = [{transform_indices = @transform_0, window_bounds = array<i64: 128, 128>}, {transform_indices = @transform_1, window_bounds = array<i64: 128, 128>}, {transform_indices = @transform_2, window_bounds = array<i64: 128, 128>}, {pipeline_mode = #tpu.pipeline_mode<synchronous>, transform_indices = @transform_3, window_bounds = array<i64: 128, 1>}, {transform_indices = @transform_4, window_bounds = array<i64: 1, 128>}, {transform_indices = @transform_5, window_bounds = array<i64: 1, 128>}]} {
    %c0_i32 = arith.constant 0 : i32
    %0 = arith.cmpi eq, %arg1, %c0_i32 : i32
    %1 = arith.extui %0 : i1 to i32
    %c0_i32_0 = arith.constant 0 : i32
    %2 = arith.cmpi ne, %1, %c0_i32_0 : i32
    scf.if %2 {
      %cst_11 = arith.constant 0.000000e+00 : f32
      %20 = vector.broadcast %cst_11 : f32 to vector<128x128xf32>
      %c0_12 = arith.constant 0 : index
      %c0_13 = arith.constant 0 : index
      %21 = vector.load %arg8[%c0_12, %c0_13] : memref<128x128xf32, #tpu.memory_space<vmem>>, vector<128x128xf32>
      tpu.vector_store %arg8[%c0_12, %c0_13], %20 {strides = array<i32>} : memref<128x128xf32, #tpu.memory_space<vmem>>, vector<128x128xf32>,
    } else {
    }
    %c0 = arith.constant 0 : index
    %c0_1 = arith.constant 0 : index
    %3 = vector.load %arg3[%c0, %c0_1] : memref<128x128xbf16, #tpu.memory_space<vmem>>, vector<128x128xbf16>
    %4 = tpu.iota {dimensions = array<i32: 0>} : vector<128x128xi32>
    %5 = tpu.iota {dimensions = array<i32: 1>} : vector<128x128xi32>
    %6 = arith.cmpi eq, %4, %5 : vector<128x128xi32>
    %7 = arith.cmpi eq, %arg0, %arg1 : i32
    %8 = vector.broadcast %7 : i1 to vector<128x128xi1>
    %9 = arith.andi %6, %8 : vector<128x128xi1>
    %cst = arith.constant 0.000000e+00 : bf16
    %10 = vector.broadcast %cst : bf16 to vector<128x128xbf16>
    %11 = arith.select %9, %10, %3 : vector<128x128xi1>, vector<128x128xbf16>
    %c0_2 = arith.constant 0 : index
    %c0_3 = arith.constant 0 : index
    %12 = vector.load %arg8[%c0_2, %c0_3] : memref<128x128xf32, #tpu.memory_space<vmem>>, vector<128x128xf32>
    %c0_4 = arith.constant 0 : index
    %c0_5 = arith.constant 0 : index
    %13 = vector.load %arg2[%c0_4, %c0_5] : memref<128x128xbf16, #tpu.memory_space<vmem>>, vector<128x128xbf16>
    %cst_6 = arith.constant dense<0.000000e+00> : vector<128x128xf32>
    %14 = tpu.matmul %13, %11, %cst_6 {dimension_numbers = #tpu.dot_dimension_numbers<[1], [0], [0], [1], [0, 0, 1, 1], [], []>} : vector<128x128xbf16>, vector<128x128xbf16>, vector<128x128xf32> -> vector<128x128xf32>
    %15 = arith.addf %12, %14 : vector<128x128xf32>
    %c0_7 = arith.constant 0 : index
    %c0_8 = arith.constant 0 : index
    %16 = vector.load %arg8[%c0_7, %c0_8] : memref<128x128xf32, #tpu.memory_space<vmem>>, vector<128x128xf32>
    tpu.vector_store %arg8[%c0_7, %c0_8], %15 {strides = array<i32>} : memref<128x128xf32, #tpu.memory_space<vmem>>, vector<128x128xf32>,
    %c0_i32_9 = arith.constant 0 : i32
    %17 = arith.cmpi eq, %arg1, %c0_i32_9 : i32
    %18 = arith.extui %17 : i1 to i32
    %c0_i32_10 = arith.constant 0 : i32
    %19 = arith.cmpi ne, %18, %c0_i32_10 : i32
    scf.if %19 {
      %c0_11 = arith.constant 0 : index
      %c0_12 = arith.constant 0 : index
      %20 = vector.load %arg4[%c0_11, %c0_12] : memref<128x128xf32, #tpu.memory_space<vmem>>, vector<128x128xf32>
      %c0_13 = arith.constant 0 : index
      %c0_14 = arith.constant 0 : index
      %21 = vector.load %arg5[%c0_13, %c0_14] : memref<128x1xf32, #tpu.memory_space<vmem>>, vector<128x1xf32>
      %22 = vector.broadcast %21 : vector<128x1xf32> to vector<128x128xf32>
      %23 = arith.mulf %20, %22 : vector<128x128xf32>
      %cst_15 = arith.constant dense<0.000000e+00> : vector<128xf32>
      %24 = vector.multi_reduction <add>, %23, %cst_15 [0] : vector<128x128xf32> to vector<128xf32>
      %25 = vector.shape_cast %24 : vector<128xf32> to vector<1x128xf32>
      %cst_16 = arith.constant 0.000000e+00 : f32
      %26 = vector.broadcast %cst_16 : f32 to vector<1x128xf32>
      %27 = arith.cmpf ogt, %25, %26 : vector<1x128xf32>
      %cst_17 = arith.constant 2.000000e-01 : f32
      %28 = vector.broadcast %cst_17 : f32 to vector<1x128xf32>
      %29 = arith.mulf %28, %25 : vector<1x128xf32>
      %30 = arith.select %27, %25, %29 : vector<1x128xi1>, vector<1x128xf32>
      %31 = arith.negf %30 : vector<1x128xf32>
      %32 = math.exp %31 : vector<1x128xf32>
      %cst_18 = arith.constant 1.000000e+00 : f32
      %33 = vector.broadcast %cst_18 : f32 to vector<1x128xf32>
      %34 = arith.addf %33, %32 : vector<1x128xf32>
      %35 = arith.divf %33, %34 : vector<1x128xf32>
      %c0_19 = arith.constant 0 : index
      %c0_20 = arith.constant 0 : index
      %36 = vector.load %arg6[%c0_19, %c0_20] : memref<1x128xf32, #tpu.memory_space<vmem>>, vector<1x128xf32>
      %cst_21 = arith.constant 1.000000e+00 : f32
      %37 = vector.broadcast %cst_21 : f32 to vector<1x128xf32>
      %38 = arith.maximumf %36, %37 : vector<1x128xf32>
      %39 = math.rsqrt %38 : vector<1x128xf32>
      %c0_22 = arith.constant 0 : index
      %c0_23 = arith.constant 0 : index
      %40 = vector.load %arg8[%c0_22, %c0_23] : memref<128x128xf32, #tpu.memory_space<vmem>>, vector<128x128xf32>
      %41 = vector.broadcast %39 : vector<1x128xf32> to vector<128x128xf32>
      %42 = arith.mulf %40, %41 : vector<128x128xf32>
      %43 = arith.subf %20, %42 : vector<128x128xf32>
      %44 = math.absf %43 : vector<128x128xf32>
      %cst_24 = arith.constant dense<0.000000e+00> : vector<128xf32>
      %45 = vector.multi_reduction <add>, %44, %cst_24 [0] : vector<128x128xf32> to vector<128xf32>
      %46 = vector.shape_cast %45 : vector<128xf32> to vector<1x128xf32>
      %47 = arith.mulf %46, %35 : vector<1x128xf32>
      %c0_25 = arith.constant 0 : index
      %c0_26 = arith.constant 0 : index
      %48 = vector.load %arg7[%c0_25, %c0_26] : memref<1x128xf32, #tpu.memory_space<vmem>>, vector<1x128xf32>
      tpu.vector_store %arg7[%c0_25, %c0_26], %47 {strides = array<i32>} : memref<1x128xf32, #tpu.memory_space<vmem>>, vector<1x128xf32>,
    } else {
    }
    return
  }
  func.func @transform_0(%arg0: i32, %arg1: i32) -> (i32, i32) {
    %c0_i32 = arith.constant 0 : i32
    %c0_i32_0 = arith.constant 0 : i32
    return %c0_i32, %arg1 : i32, i32
  }
  func.func @transform_1(%arg0: i32, %arg1: i32) -> (i32, i32) {
    %c0_i32 = arith.constant 0 : i32
    return %arg1, %arg0 : i32, i32
  }
  func.func @transform_2(%arg0: i32, %arg1: i32) -> (i32, i32) {
    %c0_i32 = arith.constant 0 : i32
    %c0_i32_0 = arith.constant 0 : i32
    return %c0_i32, %arg0 : i32, i32
  }
  func.func @transform_3(%arg0: i32, %arg1: i32) -> (i32, i32) {
    %c0_i32 = arith.constant 0 : i32
    %c0_i32_0 = arith.constant 0 : i32
    %c0_i32_1 = arith.constant 0 : i32
    return %c0_i32, %c0_i32_0 : i32, i32
  }
  func.func @transform_4(%arg0: i32, %arg1: i32) -> (i32, i32) {
    %c0_i32 = arith.constant 0 : i32
    %c0_i32_0 = arith.constant 0 : i32
    return %c0_i32, %arg0 : i32, i32
  }
  func.func @transform_5(%arg0: i32, %arg1: i32) -> (i32, i32) {
    %c0_i32 = arith.constant 0 : i32
    %c0_i32_0 = arith.constant 0 : i32
    return %c0_i32, %arg0 : i32, i32
  }
}

</mosaic_0001>

<llo_original>
// kernel: tpu_custom_call.1
$region0: #{tpu_custom_call.1}
  #allocation0 [shape = 'u32[]', space=smem, size = 0x4, offset = 0x4, fixed_abs, tag = 'smem constant byte address 0x4 - core index']
  #allocation1 [shape = 'u32[144,128]{1,0:T(1,128)}', space=vmem, size = 0x12000, scoped, tag = 'internal scratch']
  #allocation2 [shape = 'f32[128,128]{1,0:T(8,128)}', space=vmem, size = 0x10000, scoped, tag = 'scratch operand']
  %s0 = inlined_call_operand.hbm [shape: bf16[128,128], index: 0, kind: input, shape index: {}]
  %s1 = inlined_call_operand.hbm [shape: bf16[128,128], index: 1, kind: input, shape index: {}]
  %s2 = inlined_call_operand.vmem [shape: f32[128,128], index: 2, kind: input, shape index: {}]
  %s3 = inlined_call_operand.vmem [shape: f32[128,1], index: 3, kind: input, shape index: {}]
  %s4 = inlined_call_operand.vmem [shape: f32[1,128], index: 4, kind: input, shape index: {}]
  %s5 = inlined_call_operand.hbm [shape: f32[1,128], index: 5, kind: output, shape index: {}]
  %s6 = sld [smem:[#allocation0]]
  $region46: #{tpu_custom_call.1} parent=0
    _
  %s8 = ssub.s32 1, %s6
  %s9 = scalar_select 0, %s8, %s6
  $region1: #{tpu_custom_call.1} parent=0
    #allocation3 [shape = 'u8[32768]{0}', space=vmem, size = 0x8000, scoped, tag = 'input window, operand 0, single buffered']
    #allocation4 [shape = 's32[1]{0}', space=sflag, size = 0x4, scoped, tag = 'scoped memory for tpu_custom_call.1']
    #allocation5 [shape = 's32[1]{0}', space=sflag, size = 0x4, scoped, tag = 'scoped memory for tpu_custom_call.1']
    #allocation6 [shape = 'u8[32768]{0}', space=vmem, size = 0x8000, scoped, tag = 'input window, operand 1, single buffered']
    #allocation7 [shape = 's32[1]{0}', space=sflag, size = 0x4, scoped, tag = 'scoped memory for tpu_custom_call.1']
    #allocation8 [shape = 'u8[512]{0}', space=vmem, size = 0x400, scoped, tag = 'output window, operand 0, single buffered']
    %10 = vsyncpa [#allocation4], 0
    %11 = vsyncpa [#allocation7], 0
    %12 = vsyncpa [#allocation5], 0
    // Predicated region
    $region2: #{tpu_custom_call.1} parent=1 // pred_check
      _
    $region3: #{tpu_custom_call.1} parent=1 // pred_check_branch
      %14 = sbr.rel (0) target = $region5
    $region4: #{tpu_custom_call.1} parent=1 // pred_region
      %s16 = ssub.s32 1024, 1024
      %17 = vsyncadd [#allocation4], %s16
      %s18 = sshll.u32 [#allocation3], 4
      %s19 = int_to_ptr.vmem [resolvable:$true] %s18
      %24 = dma.hbm_to_vmem [thread:$0]  %s0, 1024, %s19, [#allocation4], 64, 64, 4
    $region5: #{tpu_custom_call.1} parent=1 // pred_fallthru
      _
    // Predicated region
    $region6: #{tpu_custom_call.1} parent=1 // pred_check
      _
    $region7: #{tpu_custom_call.1} parent=1 // pred_check_branch
      %26 = sbr.rel (0) target = $region9
    $region8: #{tpu_custom_call.1} parent=1 // pred_region
      %s28 = ssub.s32 1024, 1024
      %29 = vsyncadd [#allocation7], %s28
      %s30 = sshll.u32 [#allocation6], 4
      %s31 = int_to_ptr.vmem [resolvable:$true] %s30
      %36 = dma.hbm_to_vmem [thread:$0]  %s1, 1024, %s31, [#allocation7], 64, 64, 4
    $region9: #{tpu_custom_call.1} parent=1 // pred_fallthru
      _
    // Predicated region
    $region10: #{tpu_custom_call.1} parent=1 // pred_check
      _
    $region11: #{tpu_custom_call.1} parent=1 // pred_check_branch
      %38 = sbr.rel (0) target = $region13
    $region12: #{tpu_custom_call.1} parent=1 // pred_region
      _
    $region13: #{tpu_custom_call.1} parent=1 // pred_fallthru
      _
    // Predicated region
    $region14: #{tpu_custom_call.1} parent=1 // pred_check
      _
    $region15: #{tpu_custom_call.1} parent=1 // pred_check_branch
      %40 = sbr.rel (0) target = $region17
    $region16: #{tpu_custom_call.1} parent=1 // pred_region
      _
    $region17: #{tpu_custom_call.1} parent=1 // pred_fallthru
      _
    // Predicated region
    $region18: #{tpu_custom_call.1} parent=1 // pred_check
      _
    $region19: #{tpu_custom_call.1} parent=1 // pred_check_branch
      %42 = sbr.rel (0) target = $region21
    $region20: #{tpu_custom_call.1} parent=1 // pred_region
      _
    $region21: #{tpu_custom_call.1} parent=1 // pred_fallthru
      _
    // Predicated region
    $region22: #{tpu_custom_call.1} parent=1 // pred_check
      _
    $region23: #{tpu_custom_call.1} parent=1 // pred_check_branch
      %44 = sbr.rel (0) target = $region25
    $region24: #{tpu_custom_call.1} parent=1 // pred_region
      %45 = dma.done [#allocation4], 1024
    $region25: #{tpu_custom_call.1} parent=1 // pred_fallthru
      _
    // Predicated region
    $region26: #{tpu_custom_call.1} parent=1 // pred_check
      _
    $region27: #{tpu_custom_call.1} parent=1 // pred_check_branch
      %47 = sbr.rel (0) target = $region29
    $region28: #{tpu_custom_call.1} parent=1 // pred_region
      %48 = dma.done [#allocation7], 1024
    $region29: #{tpu_custom_call.1} parent=1 // pred_fallthru
      _
    %p50 = scmp.eq.s32.totalorder 0, 0
    // Predicated region
    $region30: #{tpu_custom_call.1} parent=1 // pred_check
      %p51 = pneg %p50
    $region31: #{tpu_custom_call.1} parent=1 // pred_check_branch
      %53 = sbr.rel (%p51) target = $region33
    $region32: #{tpu_custom_call.1} parent=1 // pred_region
      %54 = vst [vmem:[#allocation2] sm:$0xff] 0.0
      %55 = vst [vmem:[#allocation2 + $0x8] sm:$0xff] 0.0
      %56 = vst [vmem:[#allocation2 + $0x10] sm:$0xff] 0.0
      %57 = vst [vmem:[#allocation2 + $0x18] sm:$0xff] 0.0
      %58 = vst [vmem:[#allocation2 + $0x20] sm:$0xff] 0.0
      %59 = vst [vmem:[#allocation2 + $0x28] sm:$0xff] 0.0
      %60 = vst [vmem:[#allocation2 + $0x30] sm:$0xff] 0.0
      %61 = vst [vmem:[#allocation2 + $0x38] sm:$0xff] 0.0
      %62 = vst [vmem:[#allocation2 + $0x40] sm:$0xff] 0.0
      %63 = vst [vmem:[#allocation2 + $0x48] sm:$0xff] 0.0
      %64 = vst [vmem:[#allocation2 + $0x50] sm:$0xff] 0.0
      %65 = vst [vmem:[#allocation2 + $0x58] sm:$0xff] 0.0
      %66 = vst [vmem:[#allocation2 + $0x60] sm:$0xff] 0.0
      %67 = vst [vmem:[#allocation2 + $0x68] sm:$0xff] 0.0
      %68 = vst [vmem:[#allocation2 + $0x70] sm:$0xff] 0.0
      %69 = vst [vmem:[#allocation2 + $0x78] sm:$0xff] 0.0
    $region33: #{tpu_custom_call.1} parent=1 // pred_fallthru
      _
    %v70 = vld [vmem:[#allocation6] sm:$0xf]
    %v71 = vld [vmem:[#allocation6 + $0x4] sm:$0xf]
    %v72 = vld [vmem:[#allocation6 + $0x8] sm:$0xf]
    %v73 = vld [vmem:[#allocation6 + $0xc] sm:$0xf]
    %v74 = vld [vmem:[#allocation6 + $0x10] sm:$0xf]
    %v75 = vld [vmem:[#allocation6 + $0x14] sm:$0xf]
    %v76 = vld [vmem:[#allocation6 + $0x18] sm:$0xf]
    %v77 = vld [vmem:[#allocation6 + $0x1c] sm:$0xf]
    %v78 = vld [vmem:[#allocation6 + $0x20] sm:$0xf]
    %v79 = vld [vmem:[#allocation6 + $0x24] sm:$0xf]
    %v80 = vld [vmem:[#allocation6 + $0x28] sm:$0xf]
    %v81 = vld [vmem:[#allocation6 + $0x2c] sm:$0xf]
    %v82 = vld [vmem:[#allocation6 + $0x30] sm:$0xf]
    %v83 = vld [vmem:[#allocation6 + $0x34] sm:$0xf]
    %v84 = vld [vmem:[#allocation6 + $0x38] sm:$0xf]
    %v85 = vld [vmem:[#allocation6 + $0x3c] sm:$0xf]
    %v86 = vlaneseq
    %v87 = vshrl.u32 %v86, 7
    %v88 = vadd.s32 %v87, 8
    %v89 = vadd.s32 %v87, 16
    %v90 = vadd.s32 %v87, 24
    %v91 = vadd.s32 %v87, 32
    %v92 = vadd.s32 %v87, 40
    %v93 = vadd.s32 %v87, 48
    %v94 = vadd.s32 %v87, 56
    %v95 = vadd.s32 %v87, 64
    %v96 = vadd.s32 %v87, 72
    %v97 = vadd.s32 %v87, 80
    %v98 = vadd.s32 %v87, 88
    %v99 = vadd.s32 %v87, 96
    %v100 = vadd.s32 %v87, 104
    %v101 = vadd.s32 %v87, 112
    %v102 = vadd.s32 %v87, 120
    %v103 = vlaneseq
    %v104 = vand.u32 %v103, 127
    %vm105 = vcmp.eq.s32.totalorder %v87, %v104
    %vm106 = vcmp.eq.s32.totalorder %v88, %v104
    %vm107 = vcmp.eq.s32.totalorder %v89, %v104
    %vm108 = vcmp.eq.s32.totalorder %v90, %v104
    %vm109 = vcmp.eq.s32.totalorder %v91, %v104
    %vm110 = vcmp.eq.s32.totalorder %v92, %v104
    %vm111 = vcmp.eq.s32.totalorder %v93, %v104
    %vm112 = vcmp.eq.s32.totalorder %v94, %v104
    %vm113 = vcmp.eq.s32.totalorder %v95, %v104
    %vm114 = vcmp.eq.s32.totalorder %v96, %v104
    %vm115 = vcmp.eq.s32.totalorder %v97, %v104
    %vm116 = vcmp.eq.s32.totalorder %v98, %v104
    %vm117 = vcmp.eq.s32.totalorder %v99, %v104
    %vm118 = vcmp.eq.s32.totalorder %v100, %v104
    %vm119 = vcmp.eq.s32.totalorder %v101, %v104
    %vm120 = vcmp.eq.s32.totalorder %v102, %v104
    %p121 = scmp.eq.s32.totalorder 0, 0
    %s122 = scalar_select %p121, 1, 0
    %v123 = vstv %s122
    %vm124 = vcmp.eq.s32.totalorder %v123, 1
    %vm125 = vmand %vm105, %vm124
    %vm126 = vmand %vm106, %vm124
    %vm127 = vmand %vm107, %vm124
    %vm128 = vmand %vm108, %vm124
    %vm129 = vmand %vm109, %vm124
    %vm130 = vmand %vm110, %vm124
    %vm131 = vmand %vm111, %vm124
    %vm132 = vmand %vm112, %vm124
    %vm133 = vmand %vm113, %vm124
    %vm134 = vmand %vm114, %vm124
    %vm135 = vmand %vm115, %vm124
    %vm136 = vmand %vm116, %vm124
    %vm137 = vmand %vm117, %vm124
    %vm138 = vmand %vm118, %vm124
    %vm139 = vmand %vm119, %vm124
    %vm140 = vmand %vm120, %vm124
    %vm141 = vmpackc.low %vm125, %vm125
    %vm142 = vmpackc.low %vm126, %vm126
    %vm143 = vmpackc.low %vm127, %vm127
    %vm144 = vmpackc.low %vm128, %vm128
    %vm145 = vmpackc.low %vm129, %vm129
    %vm146 = vmpackc.low %vm130, %vm130
    %vm147 = vmpackc.low %vm131, %vm131
    %vm148 = vmpackc.low %vm132, %vm132
    %vm149 = vmpackc.low %vm133, %vm133
    %vm150 = vmpackc.low %vm134, %vm134
    %vm151 = vmpackc.low %vm135, %vm135
    %vm152 = vmpackc.low %vm136, %vm136
    %vm153 = vmpackc.low %vm137, %vm137
    %vm154 = vmpackc.low %vm138, %vm138
    %vm155 = vmpackc.low %vm139, %vm139
    %vm156 = vmpackc.low %vm140, %vm140
    %v157 = vsel %vm141, 0, %v70
    %v158 = vsel %vm142, 0, %v71
    %v159 = vsel %vm143, 0, %v72
    %v160 = vsel %vm144, 0, %v73
    %v161 = vsel %vm145, 0, %v74
    %v162 = vsel %vm146, 0, %v75
    %v163 = vsel %vm147, 0, %v76
    %v164 = vsel %vm148, 0, %v77
    %v165 = vsel %vm149, 0, %v78
    %v166 = vsel %vm150, 0, %v79
    %v167 = vsel %vm151, 0, %v80
    %v168 = vsel %vm152, 0, %v81
    %v169 = vsel %vm153, 0, %v82
    %v170 = vsel %vm154, 0, %v83
    %v171 = vsel %vm155, 0, %v84
    %v172 = vsel %vm156, 0, %v85
    %v173 = vld [vmem:[#allocation2] sm:$0xff]
    %v174 = vld [vmem:[#allocation2 + $0x8] sm:$0xff]
    %v175 = vld [vmem:[#allocation2 + $0x10] sm:$0xff]
    %v176 = vld [vmem:[#allocation2 + $0x18] sm:$0xff]
    %v177 = vld [vmem:[#allocation2 + $0x20] sm:$0xff]
    %v178 = vld [vmem:[#allocation2 + $0x28] sm:$0xff]
    %v179 = vld [vmem:[#allocation2 + $0x30] sm:$0xff]
    %v180 = vld [vmem:[#allocation2 + $0x38] sm:$0xff]
    %v181 = vld [vmem:[#allocation2 + $0x40] sm:$0xff]
    %v182 = vld [vmem:[#allocation2 + $0x48] sm:$0xff]
    %v183 = vld [vmem:[#allocation2 + $0x50] sm:$0xff]
    %v184 = vld [vmem:[#allocation2 + $0x58] sm:$0xff]
    %v185 = vld [vmem:[#allocation2 + $0x60] sm:$0xff]
    %v186 = vld [vmem:[#allocation2 + $0x68] sm:$0xff]
    %v187 = vld [vmem:[#allocation2 + $0x70] sm:$0xff]
    %v188 = vld [vmem:[#allocation2 + $0x78] sm:$0xff]
    %v189 = vld [vmem:[#allocation3] sm:$0xf]
    %v190 = vld [vmem:[#allocation3 + $0x4] sm:$0xf]
    %v191 = vld [vmem:[#allocation3 + $0x8] sm:$0xf]
    %v192 = vld [vmem:[#allocation3 + $0xc] sm:$0xf]
    %v193 = vld [vmem:[#allocation3 + $0x10] sm:$0xf]
    %v194 = vld [vmem:[#allocation3 + $0x14] sm:$0xf]
    %v195 = vld [vmem:[#allocation3 + $0x18] sm:$0xf]
    %v196 = vld [vmem:[#allocation3 + $0x1c] sm:$0xf]
    %v197 = vld [vmem:[#allocation3 + $0x20] sm:$0xf]
    %v198 = vld [vmem:[#allocation3 + $0x24] sm:$0xf]
    %v199 = vld [vmem:[#allocation3 + $0x28] sm:$0xf]
    %v200 = vld [vmem:[#allocation3 + $0x2c] sm:$0xf]
    %v201 = vld [vmem:[#allocation3 + $0x30] sm:$0xf]
    %v202 = vld [vmem:[#allocation3 + $0x34] sm:$0xf]
    %v203 = vld [vmem:[#allocation3 + $0x38] sm:$0xf]
    %v204 = vld [vmem:[#allocation3 + $0x3c] sm:$0xf]
    %v221 = vunpack.c.l.b16 %v189
    %v222 = vunpack.c.l.b16 %v190
    %v223 = vunpack.c.l.b16 %v191
    %v224 = vunpack.c.l.b16 %v192
    %v225 = vunpack.c.l.b16 %v193
    %v226 = vunpack.c.l.b16 %v194
    %v227 = vunpack.c.l.b16 %v195
    %v228 = vunpack.c.l.b16 %v196
    %v229 = vunpack.c.l.b16 %v197
    %v230 = vunpack.c.l.b16 %v198
    %v231 = vunpack.c.l.b16 %v199
    %v232 = vunpack.c.l.b16 %v200
    %v233 = vunpack.c.l.b16 %v201
    %v234 = vunpack.c.l.b16 %v202
    %v235 = vunpack.c.l.b16 %v203
    %v236 = vunpack.c.l.b16 %v204
    %v237 = vpack.c.b16 %v222, %v221
    %v238 = vpack.c.b16 %v224, %v223
    %v239 = vpack.c.b16 %v226, %v225
    %v240 = vpack.c.b16 %v228, %v227
    %v241 = vpack.c.b16 %v230, %v229
    %v242 = vpack.c.b16 %v232, %v231
    %v243 = vpack.c.b16 %v234, %v233
    %v244 = vpack.c.b16 %v236, %v235
    %v269 = vunpack.c.l.b16 %v157
    %v270 = vunpack.c.l.b16 %v158
    %v271 = vunpack.c.l.b16 %v159
    %v272 = vunpack.c.l.b16 %v160
    %v273 = vunpack.c.l.b16 %v161
    %v274 = vunpack.c.l.b16 %v162
    %v275 = vunpack.c.l.b16 %v163
    %v276 = vunpack.c.l.b16 %v164
    %v277 = vunpack.c.l.b16 %v165
    %v278 = vunpack.c.l.b16 %v166
    %v279 = vunpack.c.l.b16 %v167
    %v280 = vunpack.c.l.b16 %v168
    %v281 = vunpack.c.l.b16 %v169
    %v282 = vunpack.c.l.b16 %v170
    %v283 = vunpack.c.l.b16 %v171
    %v284 = vunpack.c.l.b16 %v172
    %v285 = vpack.c.b16 %v270, %v269
    %v286 = vpack.c.b16 %v272, %v271
    %v287 = vpack.c.b16 %v274, %v273
    %v288 = vpack.c.b16 %v276, %v275
    %v289 = vpack.c.b16 %v278, %v277
    %v290 = vpack.c.b16 %v280, %v279
    %v291 = vpack.c.b16 %v282, %v281
    %v292 = vpack.c.b16 %v284, %v283
    %301 = vmatprep.subr.bf16.mxu0 0
    %302 = vmatpush1.bf16.msra.mxu0 %v292
    %303 = vmatprep.subr.bf16.mxu0 0
    %304 = vmatpush1.bf16.msra.mxu0 %v291
    %305 = vmatprep.subr.bf16.mxu0 0
    %306 = vmatpush1.bf16.msra.mxu0 %v290
    %307 = vmatprep.subr.bf16.mxu0 0
    %308 = vmatpush1.bf16.msra.mxu0 %v289
    %309 = vmatprep.subr.bf16.mxu0 0
    %310 = vmatpush1.bf16.msra.mxu0 %v288
    %311 = vmatprep.subr.bf16.mxu0 0
    %312 = vmatpush1.bf16.msra.mxu0 %v287
    %313 = vmatprep.subr.bf16.mxu0 0
    %314 = vmatpush1.bf16.msra.mxu0 %v286
    %315 = vmatprep.subr.bf16.mxu0 0
    %316 = vmatpush1.bf16.msra.mxu0 %v285
    %317 = vmatprep.subr.bf16.mxu0 0
    %318 = vmatpush2.bf16.msra.mxu0 0
    %319 = vmatprep.subr.bf16.mxu0 0
    %320 = vmatpush2.bf16.msra.mxu0 0
    %321 = vmatprep.subr.bf16.mxu0 0
    %322 = vmatpush2.bf16.msra.mxu0 0
    %323 = vmatprep.subr.bf16.mxu0 0
    %324 = vmatpush2.bf16.msra.mxu0 0
    %325 = vmatprep.subr.bf16.mxu0 0
    %326 = vmatpush2.bf16.msra.mxu0 0
    %327 = vmatprep.subr.bf16.mxu0 0
    %328 = vmatpush2.bf16.msra.mxu0 0
    %329 = vmatprep.subr.bf16.mxu0 0
    %330 = vmatpush2.bf16.msra.mxu0 0
    %331 = vmatprep.subr.bf16.mxu0 0
    %332 = vmatpush2.bf16.msra.mxu0 0
    %333 = vmatprep.mubr.bf16.mxu0 0
    %334 = vmatmul.mubr.bf16.gmra.mxu0 %v237
    %v335 = vpop.f32.mrf.mxu0
    %v336 = vadd.f32 0.0, %v335
    %v337 = vpop.f32.mrf.mxu0
    %v338 = vpop.f32.mrf.mxu0
    %v339 = vadd.f32 0.0, %v338
    %v340 = vpop.f32.mrf.mxu0
    %341 = vmatprep.mubr.bf16.mxu0 0
    %342 = vmatmul.mubr.bf16.gmra.mxu0 %v238
    %v343 = vpop.f32.mrf.mxu0
    %v344 = vadd.f32 0.0, %v343
    %v345 = vpop.f32.mrf.mxu0
    %v346 = vpop.f32.mrf.mxu0
    %v347 = vadd.f32 0.0, %v346
    %v348 = vpop.f32.mrf.mxu0
    %349 = vmatprep.mubr.bf16.mxu0 0
    %350 = vmatmul.mubr.bf16.gmra.mxu0 %v239
    %v351 = vpop.f32.mrf.mxu0
    %v352 = vadd.f32 0.0, %v351
    %v353 = vpop.f32.mrf.mxu0
    %v354 = vpop.f32.mrf.mxu0
    %v355 = vadd.f32 0.0, %v354
    %v356 = vpop.f32.mrf.mxu0
    %357 = vmatprep.mubr.bf16.mxu0 0
    %358 = vmatmul.mubr.bf16.gmra.mxu0 %v240
    %v359 = vpop.f32.mrf.mxu0
    %v360 = vadd.f32 0.0, %v359
    %v361 = vpop.f32.mrf.mxu0
    %v362 = vpop.f32.mrf.mxu0
    %v363 = vadd.f32 0.0, %v362
    %v364 = vpop.f32.mrf.mxu0
    %365 = vmatprep.mubr.bf16.mxu0 0
    %366 = vmatmul.mubr.bf16.gmra.mxu0 %v241
    %v367 = vpop.f32.mrf.mxu0
    %v368 = vadd.f32 0.0, %v367
    %v369 = vpop.f32.mrf.mxu0
    %v370 = vpop.f32.mrf.mxu0
    %v371 = vadd.f32 0.0, %v370
    %v372 = vpop.f32.mrf.mxu0
    %373 = vmatprep.mubr.bf16.mxu0 0
    %374 = vmatmul.mubr.bf16.gmra.mxu0 %v242
    %v375 = vpop.f32.mrf.mxu0
    %v376 = vadd.f32 0.0, %v375
    %v377 = vpop.f32.mrf.mxu0
    %v378 = vpop.f32.mrf.mxu0
    %v379 = vadd.f32 0.0, %v378
    %v380 = vpop.f32.mrf.mxu0
    %381 = vmatprep.mubr.bf16.mxu0 0
    %382 = vmatmul.mubr.bf16.gmra.mxu0 %v243
    %v383 = vpop.f32.mrf.mxu0
    %v384 = vadd.f32 0.0, %v383
    %v385 = vpop.f32.mrf.mxu0
    %v386 = vpop.f32.mrf.mxu0
    %v387 = vadd.f32 0.0, %v386
    %v388 = vpop.f32.mrf.mxu0
    %389 = vmatprep.mubr.bf16.mxu0 0
    %390 = vmatmul.mubr.bf16.gmra.mxu0 %v244
    %v391 = vpop.f32.mrf.mxu0
    %v392 = vadd.f32 0.0, %v391
    %v393 = vpop.f32.mrf.mxu0
    %v394 = vpop.f32.mrf.mxu0
    %v395 = vadd.f32 0.0, %v394
    %v396 = vpop.f32.mrf.mxu0
    %397 = vdwg.mxu0
    %v398 = vadd.f32 %v173, %v336
    %v399 = vadd.f32 %v174, %v339
    %v400 = vadd.f32 %v175, %v344
    %v401 = vadd.f32 %v176, %v347
    %v402 = vadd.f32 %v177, %v352
    %v403 = vadd.f32 %v178, %v355
    %v404 = vadd.f32 %v179, %v360
    %v405 = vadd.f32 %v180, %v363
    %v406 = vadd.f32 %v181, %v368
    %v407 = vadd.f32 %v182, %v371
    %v408 = vadd.f32 %v183, %v376
    %v409 = vadd.f32 %v184, %v379
    %v410 = vadd.f32 %v185, %v384
    %v411 = vadd.f32 %v186, %v387
    %v412 = vadd.f32 %v187, %v392
    %v413 = vadd.f32 %v188, %v395
    %414 = vst [vmem:[#allocation2] sm:$0xff] %v398
    %415 = vst [vmem:[#allocation2 + $0x8] sm:$0xff] %v399
    %416 = vst [vmem:[#allocation2 + $0x10] sm:$0xff] %v400
    %417 = vst [vmem:[#allocation2 + $0x18] sm:$0xff] %v401
    %418 = vst [vmem:[#allocation2 + $0x20] sm:$0xff] %v402
    %419 = vst [vmem:[#allocation2 + $0x28] sm:$0xff] %v403
    %420 = vst [vmem:[#allocation2 + $0x30] sm:$0xff] %v404
    %421 = vst [vmem:[#allocation2 + $0x38] sm:$0xff] %v405
    %422 = vst [vmem:[#allocation2 + $0x40] sm:$0xff] %v406
    %423 = vst [vmem:[#allocation2 + $0x48] sm:$0xff] %v407
    %424 = vst [vmem:[#allocation2 + $0x50] sm:$0xff] %v408
    %425 = vst [vmem:[#allocation2 + $0x58] sm:$0xff] %v409
    %426 = vst [vmem:[#allocation2 + $0x60] sm:$0xff] %v410
    %427 = vst [vmem:[#allocation2 + $0x68] sm:$0xff] %v411
    %428 = vst [vmem:[#allocation2 + $0x70] sm:$0xff] %v412
    %429 = vst [vmem:[#allocation2 + $0x78] sm:$0xff] %v413
    // Predicated region
    $region34: #{tpu_custom_call.1} parent=1 // pred_check
      %p430 = pneg %p50
    $region35: #{tpu_custom_call.1} parent=1 // pred_check_branch
      %432 = sbr.rel (%p430) target = $region37
    $region36: #{tpu_custom_call.1} parent=1 // pred_region
      %v433 = vld [vmem:[%s2] sm:$0xff]
      %v434 = vld [vmem:[%s2 + $0x8] sm:$0xff]
      %v435 = vld [vmem:[%s2 + $0x10] sm:$0xff]
      %v436 = vld [vmem:[%s2 + $0x18] sm:$0xff]
      %v437 = vld [vmem:[%s2 + $0x20] sm:$0xff]
      %v438 = vld [vmem:[%s2 + $0x28] sm:$0xff]
      %v439 = vld [vmem:[%s2 + $0x30] sm:$0xff]
      %v440 = vld [vmem:[%s2 + $0x38] sm:$0xff]
      %v441 = vld [vmem:[%s2 + $0x40] sm:$0xff]
      %v442 = vld [vmem:[%s2 + $0x48] sm:$0xff]
      %v443 = vld [vmem:[%s2 + $0x50] sm:$0xff]
      %v444 = vld [vmem:[%s2 + $0x58] sm:$0xff]
      %v445 = vld [vmem:[%s2 + $0x60] sm:$0xff]
      %v446 = vld [vmem:[%s2 + $0x68] sm:$0xff]
      %v447 = vld [vmem:[%s2 + $0x70] sm:$0xff]
      %v448 = vld [vmem:[%s2 + $0x78] sm:$0xff]
      %v449 = vld [vmem:[%s3] sm:$0xff]
      %v450 = vld [vmem:[%s3 + $0x8] sm:$0xff]
      %v451 = vld [vmem:[%s3 + $0x10] sm:$0xff]
      %v452 = vld [vmem:[%s3 + $0x18] sm:$0xff]
      %v453 = vld [vmem:[%s3 + $0x20] sm:$0xff]
      %v454 = vld [vmem:[%s3 + $0x28] sm:$0xff]
      %v455 = vld [vmem:[%s3 + $0x30] sm:$0xff]
      %v456 = vld [vmem:[%s3 + $0x38] sm:$0xff]
      %v457 = vld [vmem:[%s3 + $0x40] sm:$0xff]
      %v458 = vld [vmem:[%s3 + $0x48] sm:$0xff]
      %v459 = vld [vmem:[%s3 + $0x50] sm:$0xff]
      %v460 = vld [vmem:[%s3 + $0x58] sm:$0xff]
      %v461 = vld [vmem:[%s3 + $0x60] sm:$0xff]
      %v462 = vld [vmem:[%s3 + $0x68] sm:$0xff]
      %v463 = vld [vmem:[%s3 + $0x70] sm:$0xff]
      %v464 = vld [vmem:[%s3 + $0x78] sm:$0xff]
      %466 = vset.pattern.permute.xlu0 0
      %467 = vperm.xlu0 %466, %v449
      %v468 = vpop.permute.xlu0 %467
      %471 = vset.pattern.permute.xlu0 0
      %472 = vperm.xlu0 %471, %v450
      %v473 = vpop.permute.xlu0 %472
      %476 = vset.pattern.permute.xlu0 0
      %477 = vperm.xlu0 %476, %v451
      %v478 = vpop.permute.xlu0 %477
      %481 = vset.pattern.permute.xlu0 0
      %482 = vperm.xlu0 %481, %v452
      %v483 = vpop.permute.xlu0 %482
      %486 = vset.pattern.permute.xlu0 0
      %487 = vperm.xlu0 %486, %v453
      %v488 = vpop.permute.xlu0 %487
      %491 = vset.pattern.permute.xlu0 0
      %492 = vperm.xlu0 %491, %v454
      %v493 = vpop.permute.xlu0 %492
      %496 = vset.pattern.permute.xlu0 0
      %497 = vperm.xlu0 %496, %v455
      %v498 = vpop.permute.xlu0 %497
      %501 = vset.pattern.permute.xlu0 0
      %502 = vperm.xlu0 %501, %v456
      %v503 = vpop.permute.xlu0 %502
      %506 = vset.pattern.permute.xlu0 0
      %507 = vperm.xlu0 %506, %v457
      %v508 = vpop.permute.xlu0 %507
      %511 = vset.pattern.permute.xlu0 0
      %512 = vperm.xlu0 %511, %v458
      %v513 = vpop.permute.xlu0 %512
      %516 = vset.pattern.permute.xlu0 0
      %517 = vperm.xlu0 %516, %v459
      %v518 = vpop.permute.xlu0 %517
      %521 = vset.pattern.permute.xlu0 0
      %522 = vperm.xlu0 %521, %v460
      %v523 = vpop.permute.xlu0 %522
      %526 = vset.pattern.permute.xlu0 0
      %527 = vperm.xlu0 %526, %v461
      %v528 = vpop.permute.xlu0 %527
      %531 = vset.pattern.permute.xlu0 0
      %532 = vperm.xlu0 %531, %v462
      %v533 = vpop.permute.xlu0 %532
      %536 = vset.pattern.permute.xlu0 0
      %537 = vperm.xlu0 %536, %v463
      %v538 = vpop.permute.xlu0 %537
      %541 = vset.pattern.permute.xlu0 0
      %542 = vperm.xlu0 %541, %v464
      %v543 = vpop.permute.xlu0 %542
      %v545 = vmul.f32 %v433, %v468
      %v546 = vmul.f32 %v434, %v473
      %v547 = vmul.f32 %v435, %v478
      %v548 = vmul.f32 %v436, %v483
      %v549 = vmul.f32 %v437, %v488
      %v550 = vmul.f32 %v438, %v493
      %v551 = vmul.f32 %v439, %v498
      %v552 = vmul.f32 %v440, %v503
      %v553 = vmul.f32 %v441, %v508
      %v554 = vmul.f32 %v442, %v513
      %v555 = vmul.f32 %v443, %v518
      %v556 = vmul.f32 %v444, %v523
      %v557 = vmul.f32 %v445, %v528
      %v558 = vmul.f32 %v446, %v533
      %v559 = vmul.f32 %v447, %v538
      %v560 = vmul.f32 %v448, %v543
      %v561 = vadd.f32 %v545, %v546
      %v562 = vadd.f32 %v561, %v547
      %v563 = vadd.f32 %v562, %v548
      %v564 = vadd.f32 %v563, %v549
      %v565 = vadd.f32 %v564, %v550
      %v566 = vadd.f32 %v565, %v551
      %v567 = vadd.f32 %v566, %v552
      %v568 = vadd.f32 %v567, %v553
      %v569 = vadd.f32 %v568, %v554
      %v570 = vadd.f32 %v569, %v555
      %v571 = vadd.f32 %v570, %v556
      %v572 = vadd.f32 %v571, %v557
      %v573 = vadd.f32 %v572, %v558
      %v574 = vadd.f32 %v573, %v559
      %v575 = vadd.f32 %v574, %v560
      %v576 = vrot.slane %v575, 4
      %v577 = vadd.f32 %v575, %v576
      %v578 = vrot.slane %v577, 2
      %v579 = vadd.f32 %v577, %v578
      %v580 = vrot.slane %v579, 1
      %v581 = vadd.f32 %v579, %v580
      %vm582 = vcmp.gt.f32.partialorder %v581, 0.0
      %v583 = vmul.f32 %v581, 0.2
      %v584 = vsel %vm582, %v581, %v583
      %v585 = vxor.u32 %v584, 2147483648
      %v586 = vmul.f32 %v585, 1.442695
      %v587 = vpow.pop %v586
      %v588 = vadd.f32 %v587, 1.0
      %v589 = vrcp.pop %v588
      %v590 = vmul.f32 1.0, %v589
      %v591 = vld [vmem:[%s4] sm:$0x1]
      %v592 = vmax.f32 %v591, 1.0
      %v593 = vrsqrt.pop %v592
      %v594 = vld [vmem:[#allocation2] sm:$0xff]
      %v595 = vld [vmem:[#allocation2 + $0x8] sm:$0xff]
      %v596 = vld [vmem:[#allocation2 + $0x10] sm:$0xff]
      %v597 = vld [vmem:[#allocation2 + $0x18] sm:$0xff]
      %v598 = vld [vmem:[#allocation2 + $0x20] sm:$0xff]
      %v599 = vld [vmem:[#allocation2 + $0x28] sm:$0xff]
      %v600 = vld [vmem:[#allocation2 + $0x30] sm:$0xff]
      %v601 = vld [vmem:[#allocation2 + $0x38] sm:$0xff]
      %v602 = vld [vmem:[#allocation2 + $0x40] sm:$0xff]
      %v603 = vld [vmem:[#allocation2 + $0x48] sm:$0xff]
      %v604 = vld [vmem:[#allocation2 + $0x50] sm:$0xff]
      %v605 = vld [vmem:[#allocation2 + $0x58] sm:$0xff]
      %v606 = vld [vmem:[#allocation2 + $0x60] sm:$0xff]
      %v607 = vld [vmem:[#allocation2 + $0x68] sm:$0xff]
      %v608 = vld [vmem:[#allocation2 + $0x70] sm:$0xff]
      %v609 = vld [vmem:[#allocation2 + $0x78] sm:$0xff]
      %v611 = vlaneseq
      %v612 = vshrl.u32 %v611, 7
      %v613 = vsub.s32 0, %v612
      %v614 = vrot.slane %v593, %v613
      %v616 = vmul.f32 %v594, %v614
      %v617 = vmul.f32 %v595, %v614
      %v618 = vmul.f32 %v596, %v614
      %v619 = vmul.f32 %v597, %v614
      %v620 = vmul.f32 %v598, %v614
      %v621 = vmul.f32 %v599, %v614
      %v622 = vmul.f32 %v600, %v614
      %v623 = vmul.f32 %v601, %v614
      %v624 = vmul.f32 %v602, %v614
      %v625 = vmul.f32 %v603, %v614
      %v626 = vmul.f32 %v604, %v614
      %v627 = vmul.f32 %v605, %v614
      %v628 = vmul.f32 %v606, %v614
      %v629 = vmul.f32 %v607, %v614
      %v630 = vmul.f32 %v608, %v614
      %v631 = vmul.f32 %v609, %v614
      %v632 = vsub.f32 %v433, %v616
      %v633 = vsub.f32 %v434, %v617
      %v634 = vsub.f32 %v435, %v618
      %v635 = vsub.f32 %v436, %v619
      %v636 = vsub.f32 %v437, %v620
      %v637 = vsub.f32 %v438, %v621
      %v638 = vsub.f32 %v439, %v622
      %v639 = vsub.f32 %v440, %v623
      %v640 = vsub.f32 %v441, %v624
      %v641 = vsub.f32 %v442, %v625
      %v642 = vsub.f32 %v443, %v626
      %v643 = vsub.f32 %v444, %v627
      %v644 = vsub.f32 %v445, %v628
      %v645 = vsub.f32 %v446, %v629
      %v646 = vsub.f32 %v447, %v630
      %v647 = vsub.f32 %v448, %v631
      %v648 = vand.u32 2147483647, %v632
      %v649 = vand.u32 2147483647, %v633
      %v650 = vand.u32 2147483647, %v634
      %v651 = vand.u32 2147483647, %v635
      %v652 = vand.u32 2147483647, %v636
      %v653 = vand.u32 2147483647, %v637
      %v654 = vand.u32 2147483647, %v638
      %v655 = vand.u32 2147483647, %v639
      %v656 = vand.u32 2147483647, %v640
      %v657 = vand.u32 2147483647, %v641
      %v658 = vand.u32 2147483647, %v642
      %v659 = vand.u32 2147483647, %v643
      %v660 = vand.u32 2147483647, %v644
      %v661 = vand.u32 2147483647, %v645
      %v662 = vand.u32 2147483647, %v646
      %v663 = vand.u32 2147483647, %v647
      %v664 = vadd.f32 %v648, %v649
      %v665 = vadd.f32 %v664, %v650
      %v666 = vadd.f32 %v665, %v651
      %v667 = vadd.f32 %v666, %v652
      %v668 = vadd.f32 %v667, %v653
      %v669 = vadd.f32 %v668, %v654
      %v670 = vadd.f32 %v669, %v655
      %v671 = vadd.f32 %v670, %v656
      %v672 = vadd.f32 %v671, %v657
      %v673 = vadd.f32 %v672, %v658
      %v674 = vadd.f32 %v673, %v659
      %v675 = vadd.f32 %v674, %v660
      %v676 = vadd.f32 %v675, %v661
      %v677 = vadd.f32 %v676, %v662
      %v678 = vadd.f32 %v677, %v663
      %v679 = vrot.slane %v678, 4
      %v680 = vadd.f32 %v678, %v679
      %v681 = vrot.slane %v680, 2
      %v682 = vadd.f32 %v680, %v681
      %v683 = vrot.slane %v682, 1
      %v684 = vadd.f32 %v682, %v683
      %v685 = vmul.f32 %v684, %v590
      %686 = vst [vmem:[#allocation8] sm:$0x1] %v685
    $region37: #{tpu_custom_call.1} parent=1 // pred_fallthru
      _
    // Predicated region
    $region38: #{tpu_custom_call.1} parent=1 // pred_check
      _
    $region39: #{tpu_custom_call.1} parent=1 // pred_check_branch
      %688 = sbr.rel (0) target = $region41
    $region40: #{tpu_custom_call.1} parent=1 // pred_region
      %s690 = ssub.s32 16, 16
      %691 = vsyncadd [#allocation5], %s690
      %s693 = sshll.u32 [#allocation8], 4
      %s694 = int_to_ptr.vmem [resolvable:$true] %s693
      %696 = dma.vmem_to_hbm [thread:$0]  %s694, 16, %s5, [#allocation5]
    $region41: #{tpu_custom_call.1} parent=1 // pred_fallthru
      _
    // Predicated region
    $region42: #{tpu_custom_call.1} parent=1 // pred_check
      _
    $region43: #{tpu_custom_call.1} parent=1 // pred_check_branch
      %698 = sbr.rel (0) target = $region45
    $region44: #{tpu_custom_call.1} parent=1 // pred_region
      %699 = dma.done [#allocation5], 16
    $region45: #{tpu_custom_call.1} parent=1 // pred_fallthru
      _
    %700 = vsyncpa [#allocation4], 1
    %701 = vsyncpa [#allocation7], 1
    %702 = vsyncpa [#allocation5], 1

</llo_original>
